<compile_context>
chip_gen: v7x
topology: tpu7x:2x2x1
jax: 0.10.0
libtpu: 0.0.40
codegen_flags: <defaults>
</compile_context>

<pallas_src>
import functools

import jax
import jax.numpy as jnp
from jax import lax
from jax.experimental import pallas as pl
from jax.experimental.pallas import tpu as pltpu

KERNEL_MUL = 2.0
KERNEL_NUM = 5
_BW_EPS = 1e-12  # guard: canonical MMD divides by bandwidth ~0 when fx == fy


def _bf16_eup_supported():
    """bf16 EUP/VPU path exists on v6e/v7x only (v5e and older: keep f32)."""
    try:
        kind = jax.devices()[0].device_kind.lower()
    except Exception:
        return False
    return ('v6' in kind) or ('v7' in kind)


_BF16_EUP = _bf16_eup_supported()


# ---------------------------------------------------------------------------
# in-kernel math
# ---------------------------------------------------------------------------
def _mmd_from_total(total, n, exp_dtype):
    """Multi-kernel Gaussian MMD; `total` is the stacked [layer1(x); layer1(y)]."""
    N = total.shape[0]                                      # == 2 * n
    sq = jnp.sum(total * total, axis=-1, keepdims=True)     # (N, 1)
    # "NT" matmul: total @ total.T without materializing a transpose.
    gram = lax.dot_general(total, total, (((1,), (1,)), ((), ())),
                           preferred_element_type=jnp.float32)
    l2 = jnp.maximum(sq + sq.T - 2.0 * gram, 0.0)           # (N, N) pairwise |.|^2

    bandwidth = jnp.maximum(jnp.sum(l2) / float(N * N - N), _BW_EPS)
    # Hoist the division out of the loop: one scalar reciprocal; per-kernel scales
    # below are compile-time constants (EUP does the exp; scaling rides the VPU slot).
    inv_bw = (KERNEL_MUL ** (KERNEL_NUM // 2)) / bandwidth
    scaled = (l2 * (-inv_bw)).astype(exp_dtype)             # bf16 on v6e/v7x @ large N
    kern = jnp.zeros_like(l2)                                # f32 accumulator
    for i in range(KERNEL_NUM):
        kern = kern + jnp.exp(scaled * (1.0 / (KERNEL_MUL ** i))).astype(jnp.float32)

    # mean(XX + YY - XY - YX) == (s^T K s) / n^2 with s = [+1]*n ++ [-1]*n.
    # Signed quadrant reduction: one (N,N) multiply, one lane reduce, one tiny
    # multiply, one sublane reduce (no full-size iotas/compare/select).
    col_sign = jnp.where(lax.broadcasted_iota(jnp.int32, (1, N), 1) < n, 1.0, -1.0)
    row_sign = jnp.where(lax.broadcasted_iota(jnp.int32, (N, 1), 0) < n, 1.0, -1.0)
    row_tot = jnp.sum(kern * col_sign, axis=1, keepdims=True)      # (N, 1)
    return jnp.sum(row_tot * row_sign) / float(n * n)


def _coral(fx, fy):
    d = fx.shape[1]
    ns, nt = fx.shape[0], fy.shape[0]
    xm = jnp.mean(fx, axis=0, keepdims=True) - fx
    # "TN" matmul: xm.T @ xm without an explicit transpose.
    xc = lax.dot_general(xm, xm, (((0,), (0,)), ((), ())),
                         preferred_element_type=jnp.float32) / (ns - 1)
    xmt = jnp.mean(fy, axis=0, keepdims=True) - fy
    xct = lax.dot_general(xmt, xmt, (((0,), (0,)), ((), ())),
                          preferred_element_type=jnp.float32) / (nt - 1)
    diff = xc - xct
    return jnp.sum(diff * diff) / (4.0 * d * d)


# ---------------------------------------------------------------------------
# fused kernel
# ---------------------------------------------------------------------------
def net_dan_kernel(xy_ref, p_ref, div_ref, pred_ref, *, method, n,
                   input_dim, hidden_dim, output_dim, offsets,
                   use_bf16_mm, exp_dtype):
    o_w1, o_b1, o_w2, o_b2, o_w3, o_b3 = offsets
    # Static, 8-row-aligned views into the single packed parameter operand.
    w1 = p_ref[o_w1:o_w1 + input_dim, :hidden_dim]     # (in,  hid)
    b1 = p_ref[o_b1:o_b1 + 1, :hidden_dim]             # (1,   hid)
    w2 = p_ref[o_w2:o_w2 + hidden_dim, :hidden_dim]    # (hid, hid)
    b2 = p_ref[o_b2:o_b2 + 1, :hidden_dim]             # (1,   hid)
    w3t = p_ref[o_w3:o_w3 + output_dim, :hidden_dim]   # (out, hid)  (stored transposed)
    b3 = p_ref[o_b3:o_b3 + 1, :output_dim]             # (1,   out)

    def mm(a, b):
        # bf16 MXU inputs (f32 accumulation) only when shape-gated on (realistic sizes);
        # at toy sizes this branch is never traced and everything stays f32.
        if use_bf16_mm:
            a = a.astype(jnp.bfloat16)
            b = b.astype(jnp.bfloat16)
        return jnp.dot(a, b, preferred_element_type=jnp.float32)

    # layer1 on the stacked [x; y]: two matmuls total, and the result is used
    # directly as the MMD `total` (no in-kernel concatenate).
    xy = xy_ref[...]
    h = jnp.maximum(mm(xy, w1) + b1, 0.0)
    h = jnp.maximum(mm(h, w2) + b2, 0.0)

    if method == 'DAN':
        div = _mmd_from_total(h, n, exp_dtype)
    elif method == 'CORAL':
        div = _coral(h[:n, :], h[n:, :])
    else:
        raise ValueError(method)

    # Scalar divergence goes straight to SMEM (no masked vst / separate VMEM tile DMA).
    div_ref[0, 0] = div

    fx = h[:n, :]                         # n % 8 == 0 -> sublane-aligned split (free)
    if output_dim == 1:
        # An N=1 matmul wastes the MXU; broadcast-mul + lane reduce on VPU/XLU.
        pred = jnp.sum(fx * w3t, axis=-1, keepdims=True) + b3
    else:
        pred = lax.dot_general(fx, w3t, (((1,), (1,)), ((), ())),
                               preferred_element_type=jnp.float32) + b3
    pred_ref[...] = pred


# ---------------------------------------------------------------------------
# parameter packing — done ONCE at init (hoisted out of the per-call path)
# ---------------------------------------------------------------------------
def pack_params(params):
    """Pack (w1,b1,w2,b2,w3,b3) into one 2-D operand (rows padded to multiples of 8).

    Inputs use the kernel layout: w* is (in, out), b* is (1, out). w3 is stored
    transposed as (out, hid) so the output_dim==1 VPU path needs no transpose.
    Returns (packed_array, per-block row offsets, (input_dim, hidden_dim, output_dim)).
    Call once at model-init time and reuse across forward calls.
    """
    w1, b1, w2, b2, w3, b3 = params
    input_dim, hidden = w1.shape
    out = w3.shape[1]
    width = max(hidden, out)
    blocks = (w1, b1, w2, b2, w3.T, b3)
    padded, offsets, off = [], [], 0
    for blk in blocks:
        r, c = blk.shape
        rp = -(-r // 8) * 8
        buf = jnp.zeros((rp, width), jnp.float32).at[:r, :c].set(blk)
        padded.append(buf)
        offsets.append(off)
        off += rp
    return jnp.concatenate(padded, axis=0), tuple(offsets), (input_dim, hidden, out)


# ---------------------------------------------------------------------------
# wrapper
# ---------------------------------------------------------------------------
@functools.partial(jax.jit, static_argnames=('offsets', 'dims', 'method'))
def net_dan_forward(x, y, packed, *, offsets, dims, method='DAN'):
    """Returns (total_div, layer2(layer1(x))) — matches net_DAN.forward."""
    input_dim, hidden_dim, output_dim = dims
    n = x.shape[0]
    # Correctness contract (trace-time checks on static shapes):
    assert x.shape[0] == y.shape[0], "net_DAN MMD/stacking requires matching batch sizes"
    assert x.shape[1] == input_dim and y.shape[1] == input_dim, "input_dim mismatch"
    assert n % 8 == 0, "batch must be a multiple of 8 (f32 sublane) for aligned splits"

    xy = jnp.concatenate([x, y], axis=0)  # (2n, in): one stacked operand, one DMA

    # Shape/device-gated precision levers (inactive at toy sizes):
    use_bf16_mm = (hidden_dim >= 128) and (2 * n >= 256)
    use_bf16_exp = (2 * n >= 256) and _BF16_EUP and (method == 'DAN')
    exp_dtype = jnp.bfloat16 if use_bf16_exp else jnp.float32

    kernel = functools.partial(
        net_dan_kernel, method=method, n=n, input_dim=input_dim,
        hidden_dim=hidden_dim, output_dim=output_dim, offsets=offsets,
        use_bf16_mm=use_bf16_mm, exp_dtype=exp_dtype)

    # Rough live-VMEM estimate (activations + ~4 live (2n,2n) f32 MMD intermediates,
    # x2 safety).  Only raise the scoped-VMEM limit when the smallest default (v5e:
    # 16 MiB) would be exceeded; cap below v7x's 64 MiB physical.
    N = 2 * n
    est_bytes = 2 * 4 * (4 * N * N + 3 * N * max(hidden_dim, input_dim) + packed.size)
    compiler_params = None
    if est_bytes > (16 << 20):
        compiler_params = pltpu.CompilerParams(
            vmem_limit_bytes=min(int(est_bytes), 60 << 20))

    # No grid: all operands are a few KiB at these sizes and fit VMEM on v5e/v6e/v7x.
    # If many independent (x, y) problems are evaluated, add a leading "parallel"
    # grid axis over problems so both v7x TensorCores are used.
    div, pred = pl.pallas_call(
        kernel,
        out_shape=(jax.ShapeDtypeStruct((1, 1), jnp.float32),
                   jax.ShapeDtypeStruct((n, output_dim), jnp.float32)),
        in_specs=[pl.BlockSpec(memory_space=pltpu.MemorySpace.VMEM),
                  pl.BlockSpec(memory_space=pltpu.MemorySpace.VMEM)],
        out_specs=(pl.BlockSpec(memory_space=pltpu.MemorySpace.SMEM),
                   pl.BlockSpec(memory_space=pltpu.MemorySpace.VMEM)),
        compiler_params=compiler_params,
    )(xy, packed)
    return div[0, 0], pred


# ---------------------------------------------------------------------------
# deterministic parameter init (PyTorch default Linear init: U(-k, k), k=1/sqrt(in))
# ---------------------------------------------------------------------------
def init_params(key, input_dim, hidden_dim, output_dim):
    def linear(k, in_f, out_f):
        kw, kb = jax.random.split(k)
        bound = 1.0 / jnp.sqrt(in_f)
        w_pt = jax.random.uniform(kw, (out_f, in_f), jnp.float32, -bound, bound)
        b_pt = jax.random.uniform(kb, (out_f,), jnp.float32, -bound, bound)
        # kernel layout: (in, out) weight, (1, out) bias
        return w_pt.T, b_pt.reshape(1, out_f)

    k1, k2, k3 = jax.random.split(key, 3)
    w1, b1 = linear(k1, input_dim, hidden_dim)
    w2, b2 = linear(k2, hidden_dim, hidden_dim)
    w3, b3 = linear(k3, hidden_dim, output_dim)
    return (w1, b1, w2, b2, w3, b3)


# ---------------------------------------------------------------------------
# pure-JAX reference (original formulation) for a sanity check
# ---------------------------------------------------------------------------
def _reference(x, y, params, method='DAN'):
    w1, b1, w2, b2, w3, b3 = params

    def layer1(z):
        h = jnp.maximum(z @ w1 + b1, 0.0)
        return jnp.maximum(h @ w2 + b2, 0.0)

    fx, fy = layer1(x), layer1(y)
    if method == 'DAN':
        n = fx.shape[0]
        total = jnp.concatenate([fx, fy], axis=0)
        sq = jnp.sum(total * total, axis=-1, keepdims=True)
        l2 = jnp.maximum(sq + sq.T - 2.0 * (total @ total.T), 0.0)
        N = 2 * n
        bw = jnp.maximum(jnp.sum(l2) / (N * N - N), _BW_EPS)
        bw = bw / (KERNEL_MUL ** (KERNEL_NUM // 2))
        kern = sum(jnp.exp(-l2 / (bw * KERNEL_MUL ** i)) for i in range(KERNEL_NUM))
        div = jnp.mean(kern[:n, :n] + kern[n:, n:] - kern[:n, n:] - kern[n:, :n])
    elif method == 'CORAL':
        d = fx.shape[1]
        ns, nt = fx.shape[0], fy.shape[0]
        xm = jnp.mean(fx, 0, keepdims=True) - fx
        xc = xm.T @ xm / (ns - 1)
        xmt = jnp.mean(fy, 0, keepdims=True) - fy
        xct = xmt.T @ xmt / (nt - 1)
        div = jnp.sum((xc - xct) ** 2) / (4.0 * d * d)
    else:
        raise ValueError(method)
    return div, fx @ w3 + b3


if __name__ == "__main__":
    batch, input_dim, hidden_dim, output_dim = 8, 16, 32, 1

    key = jax.random.PRNGKey(0)
    kp, kx, ky = jax.random.split(key, 3)
    params = init_params(kp, input_dim, hidden_dim, output_dim)
    x = jax.random.normal(kx, (batch, input_dim), jnp.float32)   # source domain
    y = jax.random.normal(ky, (batch, input_dim), jnp.float32)   # target domain

    # Pack once at init (hoisted out of the per-call path).
    packed, offsets, dims = pack_params(params)
    packed = jax.block_until_ready(packed)

    # DAN path
    total_div, pred = net_dan_forward(x, y, packed, offsets=offsets, dims=dims,
                                      method='DAN')
    jax.block_until_ready((total_div, pred))
    ref_div, ref_pred = _reference(x, y, params, method='DAN')
    assert pred.shape == (batch, output_dim)
    assert jnp.allclose(pred, ref_pred, rtol=2e-2, atol=2e-3)
    assert jnp.allclose(total_div, ref_div, rtol=2e-2, atol=2e-3)

    # CORAL path
    coral_div, coral_pred = net_dan_forward(x, y, packed, offsets=offsets, dims=dims,
                                            method='CORAL')
    jax.block_until_ready((coral_div, coral_pred))
    ref_cdiv, ref_cpred = _reference(x, y, params, method='CORAL')
    assert jnp.allclose(coral_pred, ref_cpred, rtol=2e-2, atol=2e-3)
    assert jnp.allclose(coral_div, ref_cdiv, rtol=2e-2, atol=2e-3)

    print("KERNEL_OK")
</pallas_src>

<mosaic_0001>
module attributes {stable_mosaic.version = 11 : i64} {
  func.func @net_dan_kernel(%arg0: memref<16x16xf32, #tpu.memory_space<vmem>>, %arg1: memref<80x32xf32, #tpu.memory_space<vmem>>, %arg2: memref<1x1xf32, #tpu.memory_space<smem>>, %arg3: memref<8x1xf32, #tpu.memory_space<vmem>>) attributes {dimension_semantics = [], scalar_prefetch = 0 : i64, scratch_operands = 0 : i64, tpu.core_type = #tpu.core_type<tc>} {
    %c0 = arith.constant 0 : index
    %c0_0 = arith.constant 0 : index
    %0 = vector.load %arg1[%c0, %c0_0] : memref<80x32xf32, #tpu.memory_space<vmem>>, vector<16x32xf32>
    %c16 = arith.constant 16 : index
    %c0_1 = arith.constant 0 : index
    %1 = vector.load %arg1[%c16, %c0_1] : memref<80x32xf32, #tpu.memory_space<vmem>>, vector<1x32xf32>
    %c24 = arith.constant 24 : index
    %c0_2 = arith.constant 0 : index
    %2 = vector.load %arg1[%c24, %c0_2] : memref<80x32xf32, #tpu.memory_space<vmem>>, vector<32x32xf32>
    %c56 = arith.constant 56 : index
    %c0_3 = arith.constant 0 : index
    %3 = vector.load %arg1[%c56, %c0_3] : memref<80x32xf32, #tpu.memory_space<vmem>>, vector<1x32xf32>
    %c64 = arith.constant 64 : index
    %c0_4 = arith.constant 0 : index
    %4 = vector.load %arg1[%c64, %c0_4] : memref<80x32xf32, #tpu.memory_space<vmem>>, vector<1x32xf32>
    %c72 = arith.constant 72 : index
    %c0_5 = arith.constant 0 : index
    %5 = vector.load %arg1[%c72, %c0_5] : memref<80x32xf32, #tpu.memory_space<vmem>>, vector<1x1xf32>
    %c0_6 = arith.constant 0 : index
    %c0_7 = arith.constant 0 : index
    %6 = vector.load %arg0[%c0_6, %c0_7] : memref<16x16xf32, #tpu.memory_space<vmem>>, vector<16x16xf32>
    %cst = arith.constant dense<0.000000e+00> : vector<16x32xf32>
    %7 = tpu.matmul %6, %0, %cst {dimension_numbers = #tpu.dot_dimension_numbers<[1], [0], [0], [1], [0, 0, 1, 1], [], []>} : vector<16x16xf32>, vector<16x32xf32>, vector<16x32xf32> -> vector<16x32xf32>
    %8 = vector.broadcast %1 : vector<1x32xf32> to vector<16x32xf32>
    %9 = arith.addf %7, %8 : vector<16x32xf32>
    %cst_8 = arith.constant 0.000000e+00 : f32
    %10 = vector.broadcast %cst_8 : f32 to vector<16x32xf32>
    %11 = arith.maximumf %9, %10 : vector<16x32xf32>
    %cst_9 = arith.constant dense<0.000000e+00> : vector<16x32xf32>
    %12 = tpu.matmul %11, %2, %cst_9 {dimension_numbers = #tpu.dot_dimension_numbers<[1], [0], [0], [1], [0, 0, 1, 1], [], []>} : vector<16x32xf32>, vector<32x32xf32>, vector<16x32xf32> -> vector<16x32xf32>
    %13 = vector.broadcast %3 : vector<1x32xf32> to vector<16x32xf32>
    %14 = arith.addf %12, %13 : vector<16x32xf32>
    %cst_10 = arith.constant 0.000000e+00 : f32
    %15 = vector.broadcast %cst_10 : f32 to vector<16x32xf32>
    %16 = arith.maximumf %14, %15 : vector<16x32xf32>
    %17 = arith.mulf %16, %16 : vector<16x32xf32>
    %cst_11 = arith.constant dense<0.000000e+00> : vector<16xf32>
    %18 = vector.multi_reduction <add>, %17, %cst_11 [1] : vector<16x32xf32> to vector<16xf32>
    %19 = vector.shape_cast %18 : vector<16xf32> to vector<16x1xf32>
    %cst_12 = arith.constant dense<0.000000e+00> : vector<16x16xf32>
    %20 = tpu.matmul %16, %16, %cst_12 {dimension_numbers = #tpu.dot_dimension_numbers<[1], [1], [0], [0], [0, 0, 1, 0], [], []>} : vector<16x32xf32>, vector<16x32xf32>, vector<16x16xf32> -> vector<16x16xf32>
    %21 = tpu.transpose %19, [1, 0] : vector<16x1xf32> -> vector<1x16xf32>
    %22 = vector.broadcast %19 : vector<16x1xf32> to vector<16x16xf32>
    %23 = vector.broadcast %21 : vector<1x16xf32> to vector<16x16xf32>
    %24 = arith.addf %22, %23 : vector<16x16xf32>
    %cst_13 = arith.constant 2.000000e+00 : f32
    %25 = vector.broadcast %cst_13 : f32 to vector<16x16xf32>
    %26 = arith.mulf %25, %20 : vector<16x16xf32>
    %27 = arith.subf %24, %26 : vector<16x16xf32>
    %cst_14 = arith.constant 0.000000e+00 : f32
    %28 = vector.broadcast %cst_14 : f32 to vector<16x16xf32>
    %29 = arith.maximumf %27, %28 : vector<16x16xf32>
    %30 = vector.shape_cast %29 : vector<16x16xf32> to vector<1x16x16xf32>
    %cst_15 = arith.constant dense<0.000000e+00> : vector<1xf32>
    %31 = vector.multi_reduction <add>, %30, %cst_15 [1, 2] : vector<1x16x16xf32> to vector<1xf32>
    %32 = vector.shape_cast %31 : vector<1xf32> to vector<1x1x1xf32>
    %33 = vector.extract %32[0, 0, 0] : f32 from vector<1x1x1xf32>
    %cst_16 = arith.constant 2.400000e+02 : f32
    %34 = arith.divf %33, %cst_16 : f32
    %cst_17 = arith.constant 9.99999996E-13 : f32
    %35 = arith.maximumf %34, %cst_17 : f32
    %cst_18 = arith.constant 4.000000e+00 : f32
    %36 = arith.divf %cst_18, %35 : f32
    %cst_19 = arith.constant 0.000000e+00 : f32
    %37 = arith.subf %cst_19, %36 : f32
    %38 = vector.broadcast %37 : f32 to vector<16x16xf32>
    %39 = arith.mulf %29, %38 : vector<16x16xf32>
    %cst_20 = arith.constant 0.000000e+00 : f32
    %40 = vector.broadcast %cst_20 : f32 to vector<16x16xf32>
    %cst_21 = arith.constant 1.000000e+00 : f32
    %41 = vector.broadcast %cst_21 : f32 to vector<16x16xf32>
    %42 = arith.mulf %39, %41 : vector<16x16xf32>
    %43 = math.exp %42 : vector<16x16xf32>
    %44 = arith.addf %40, %43 : vector<16x16xf32>
    %cst_22 = arith.constant 5.000000e-01 : f32
    %45 = vector.broadcast %cst_22 : f32 to vector<16x16xf32>
    %46 = arith.mulf %39, %45 : vector<16x16xf32>
    %47 = math.exp %46 : vector<16x16xf32>
    %48 = arith.addf %44, %47 : vector<16x16xf32>
    %cst_23 = arith.constant 2.500000e-01 : f32
    %49 = vector.broadcast %cst_23 : f32 to vector<16x16xf32>
    %50 = arith.mulf %39, %49 : vector<16x16xf32>
    %51 = math.exp %50 : vector<16x16xf32>
    %52 = arith.addf %48, %51 : vector<16x16xf32>
    %cst_24 = arith.constant 1.250000e-01 : f32
    %53 = vector.broadcast %cst_24 : f32 to vector<16x16xf32>
    %54 = arith.mulf %39, %53 : vector<16x16xf32>
    %55 = math.exp %54 : vector<16x16xf32>
    %56 = arith.addf %52, %55 : vector<16x16xf32>
    %cst_25 = arith.constant 6.250000e-02 : f32
    %57 = vector.broadcast %cst_25 : f32 to vector<16x16xf32>
    %58 = arith.mulf %39, %57 : vector<16x16xf32>
    %59 = math.exp %58 : vector<16x16xf32>
    %60 = arith.addf %56, %59 : vector<16x16xf32>
    %61 = tpu.iota {dimensions = array<i32: 1>} : vector<1x16xi32>
    %c8_i32 = arith.constant 8 : i32
    %62 = vector.broadcast %c8_i32 : i32 to vector<1x16xi32>
    %63 = arith.cmpi slt, %61, %62 : vector<1x16xi32>
    %cst_26 = arith.constant 1.000000e+00 : f32
    %cst_27 = arith.constant -1.000000e+00 : f32
    %64 = vector.broadcast %cst_26 : f32 to vector<1x16xf32>
    %65 = vector.broadcast %cst_27 : f32 to vector<1x16xf32>
    %66 = arith.select %63, %64, %65 : vector<1x16xi1>, vector<1x16xf32>
    %67 = tpu.iota {dimensions = array<i32: 0>} : vector<16x1xi32>
    %c8_i32_28 = arith.constant 8 : i32
    %68 = vector.broadcast %c8_i32_28 : i32 to vector<16x1xi32>
    %69 = arith.cmpi slt, %67, %68 : vector<16x1xi32>
    %cst_29 = arith.constant 1.000000e+00 : f32
    %cst_30 = arith.constant -1.000000e+00 : f32
    %70 = vector.broadcast %cst_29 : f32 to vector<16x1xf32>
    %71 = vector.broadcast %cst_30 : f32 to vector<16x1xf32>
    %72 = arith.select %69, %70, %71 : vector<16x1xi1>, vector<16x1xf32>
    %73 = vector.broadcast %66 : vector<1x16xf32> to vector<16x16xf32>
    %74 = arith.mulf %60, %73 : vector<16x16xf32>
    %cst_31 = arith.constant dense<0.000000e+00> : vector<16xf32>
    %75 = vector.multi_reduction <add>, %74, %cst_31 [1] : vector<16x16xf32> to vector<16xf32>
    %76 = vector.shape_cast %75 : vector<16xf32> to vector<16x1xf32>
    %77 = arith.mulf %76, %72 : vector<16x1xf32>
    %78 = vector.shape_cast %77 : vector<16x1xf32> to vector<1x16x1xf32>
    %cst_32 = arith.constant dense<0.000000e+00> : vector<1xf32>
    %79 = vector.multi_reduction <add>, %78, %cst_32 [1, 2] : vector<1x16x1xf32> to vector<1xf32>
    %80 = vector.shape_cast %79 : vector<1xf32> to vector<1x1x1xf32>
    %81 = vector.extract %80[0, 0, 0] : f32 from vector<1x1x1xf32>
    %cst_33 = arith.constant 6.400000e+01 : f32
    %82 = arith.divf %81, %cst_33 : f32
    %c0_34 = arith.constant 0 : index
    %c0_35 = arith.constant 0 : index
    %83 = memref.load %arg2[%c0_34, %c0_35] : memref<1x1xf32, #tpu.memory_space<smem>>
    memref.store %82, %arg2[%c0_34, %c0_35] : memref<1x1xf32, #tpu.memory_space<smem>>
    %84 = vector.extract_strided_slice %16 {offsets = [0, 0], sizes = [8, 32], strides = [1, 1]} : vector<16x32xf32> to vector<8x32xf32>
    %85 = vector.broadcast %4 : vector<1x32xf32> to vector<8x32xf32>
    %86 = arith.mulf %84, %85 : vector<8x32xf32>
    %cst_36 = arith.constant dense<0.000000e+00> : vector<8xf32>
    %87 = vector.multi_reduction <add>, %86, %cst_36 [1] : vector<8x32xf32> to vector<8xf32>
    %88 = vector.shape_cast %87 : vector<8xf32> to vector<8x1xf32>
    %89 = vector.broadcast %5 : vector<1x1xf32> to vector<8x1xf32>
    %90 = arith.addf %88, %89 : vector<8x1xf32>
    %c0_37 = arith.constant 0 : index
    %c0_38 = arith.constant 0 : index
    %91 = vector.load %arg3[%c0_37, %c0_38] : memref<8x1xf32, #tpu.memory_space<vmem>>, vector<8x1xf32>
    tpu.vector_store %arg3[%c0_37, %c0_38], %90 {strides = array<i32>} : memref<8x1xf32, #tpu.memory_space<vmem>>, vector<8x1xf32>,
    return
  }
}

</mosaic_0001>

<llo_original>
// kernel: net_dan_forward.1
$region0: #{net_dan_forward.1}
  #allocation0 [shape = 'u32[]', space=smem, size = 0x4, offset = 0x4, fixed_abs, tag = 'smem constant byte address 0x4 - core index']
  #allocation1 [shape = 'u32[144,128]{1,0:T(1,128)}', space=vmem, size = 0x12000, scoped, tag = 'internal scratch']
  %s0 = inlined_call_operand.vmem [shape: f32[16,16], index: 0, kind: input, shape index: {}]
  %s1 = inlined_call_operand.vmem [shape: f32[80,32], index: 1, kind: input, shape index: {}]
  %s2 = inlined_call_operand.hbm [shape: f32[1,1], index: 2, kind: output, shape index: {0}]
  %s3 = inlined_call_operand.vmem [shape: f32[8,1], index: 3, kind: output, shape index: {1}]
  %4 = xla_tuple %s2, %s3
  %s5 = sld [smem:[#allocation0]]
  $region26: #{net_dan_forward.1} parent=0
    _
  %s7 = ssub.s32 1, %s5
  %s8 = scalar_select 0, %s7, %s5
  $region1: #{net_dan_forward.1} parent=0
    #allocation2 [shape = 'u8[512]{0}', space=smem, size = 0x200, scoped, tag = 'output window, operand 0, single buffered']
    #allocation3 [shape = 's32[1]{0}', space=sflag, size = 0x4, scoped, tag = 'scoped memory for net_dan_forward.1']
    %9 = vsyncpa [#allocation3], 0
    // Predicated region
    $region2: #{net_dan_forward.1} parent=1 // pred_check
      _
    $region3: #{net_dan_forward.1} parent=1 // pred_check_branch
      %11 = sbr.rel (0) target = $region5
    $region4: #{net_dan_forward.1} parent=1 // pred_region
      _
    $region5: #{net_dan_forward.1} parent=1 // pred_fallthru
      _
    // Predicated region
    $region6: #{net_dan_forward.1} parent=1 // pred_check
      _
    $region7: #{net_dan_forward.1} parent=1 // pred_check_branch
      %13 = sbr.rel (0) target = $region9
    $region8: #{net_dan_forward.1} parent=1 // pred_region
      _
    $region9: #{net_dan_forward.1} parent=1 // pred_fallthru
      _
    %v14 = vld [vmem:[%s1] sm:$0xff]
    %v15 = vld [vmem:[%s1 + $0x8] sm:$0xff]
    %v16 = vld [vmem:[%s1 + $0x10] sm:$0x1]
    %v17 = vld [vmem:[%s1 + $0x18] sm:$0xff]
    %v18 = vld [vmem:[%s1 + $0x20] sm:$0xff]
    %v19 = vld [vmem:[%s1 + $0x28] sm:$0xff]
    %v20 = vld [vmem:[%s1 + $0x30] sm:$0xff]
    %v21 = vld [vmem:[%s1 + $0x38] sm:$0x1]
    %v22 = vld [vmem:[%s1 + $0x40] sm:$0x1]
    %v23 = vld [vmem:[%s1 + $0x48] sm:$0x1]
    %v24 = vld [vmem:[%s0] sm:$0xff]
    %v25 = vld [vmem:[%s0 + $0x8] sm:$0xff]
    %v26 = vlaneseq
    %v27 = vshrl.u32 %v26, 7
    %v28 = vsub.s32 0, %v27
    %v29 = vrot.slane %v16, %v28
    %vm30 = vcmask 130048
    %v32 = vsel %vm30, %v24, 0
    %v35 = vsel %vm30, %v25, 0
    %37 = vmatprep.subr.mxu0 0.0
    %38 = vmatpush1.msra.mxu0 %v14
    %39 = vmatprep.subr.mxu0 0.0
    %40 = vmatpush1.msra.mxu0 %v15
    %41 = vmatprep.subr.mxu0 0.0
    %42 = vmatpush1.msra.mxu0 0.0
    %43 = vmatprep.subr.mxu0 0.0
    %44 = vmatpush1.msra.mxu0 0.0
    %45 = vmatprep.subr.mxu0 0.0
    %46 = vmatpush1.msra.mxu0 0.0
    %47 = vmatprep.subr.mxu0 0.0
    %48 = vmatpush1.msra.mxu0 0.0
    %49 = vmatprep.subr.mxu0 0.0
    %50 = vmatpush1.msra.mxu0 0.0
    %51 = vmatprep.subr.mxu0 0.0
    %52 = vmatpush1.msra.mxu0 0.0
    %53 = vmatprep.subr.mxu0 0.0
    %54 = vmatpush1.msra.mxu0 0.0
    %55 = vmatprep.subr.mxu0 0.0
    %56 = vmatpush1.msra.mxu0 0.0
    %57 = vmatprep.subr.mxu0 0.0
    %58 = vmatpush1.msra.mxu0 0.0
    %59 = vmatprep.subr.mxu0 0.0
    %60 = vmatpush1.msra.mxu0 0.0
    %61 = vmatprep.subr.mxu0 0.0
    %62 = vmatpush1.msra.mxu0 0.0
    %63 = vmatprep.subr.mxu0 0.0
    %64 = vmatpush1.msra.mxu0 0.0
    %65 = vmatprep.subr.mxu0 0.0
    %66 = vmatpush1.msra.mxu0 0.0
    %67 = vmatprep.subr.mxu0 0.0
    %68 = vmatpush1.msra.mxu0 0.0
    %69 = vmatprep.subr.mxu0 0.0
    %70 = vmatpush1.msra.mxu0 0.0
    %71 = vmatprep.subr.mxu0 0.0
    %72 = vmatpush1.msra.mxu0 0.0
    %73 = vmatprep.subr.mxu0 0.0
    %74 = vmatpush1.msra.mxu0 0.0
    %75 = vmatprep.subr.mxu0 0.0
    %76 = vmatpush1.msra.mxu0 0.0
    %77 = vmatprep.subr.mxu0 0.0
    %78 = vmatpush1.msra.mxu0 0.0
    %79 = vmatprep.subr.mxu0 0.0
    %80 = vmatpush1.msra.mxu0 0.0
    %81 = vmatprep.subr.mxu0 0.0
    %82 = vmatpush1.msra.mxu0 0.0
    %83 = vmatprep.subr.mxu0 0.0
    %84 = vmatpush1.msra.mxu0 0.0
    %85 = vmatprep.subr.mxu0 0.0
    %86 = vmatpush1.msra.mxu0 0.0
    %87 = vmatprep.subr.mxu0 0.0
    %88 = vmatpush1.msra.mxu0 0.0
    %89 = vmatprep.subr.mxu0 0.0
    %90 = vmatpush1.msra.mxu0 0.0
    %91 = vmatprep.subr.mxu0 0.0
    %92 = vmatpush1.msra.mxu0 0.0
    %93 = vmatprep.subr.mxu0 0.0
    %94 = vmatpush1.msra.mxu0 0.0
    %95 = vmatprep.subr.mxu0 0.0
    %96 = vmatpush1.msra.mxu0 0.0
    %97 = vmatprep.subr.mxu0 0.0
    %98 = vmatpush1.msra.mxu0 0.0
    %99 = vmatprep.subr.mxu0 0.0
    %100 = vmatpush1.msra.mxu0 0.0
    %101 = vmatprep.mubr.f32.mxu0 0.0
    %102 = vmatmul.mubr.f32.gmra.mrb[0].mxu0 %v32
    %v103 = vpop.f32.mrb[0].mxu0
    %v104 = vadd.f32 %v29, %v103
    %v105 = vpop.f32.mrb[0].mxu0
    %106 = vmatprep.mubr.f32.mxu0 0.0
    %107 = vmatmul.mubr.f32.gmra.mrb[0].mxu0 %v35
    %v108 = vpop.f32.mrb[0].mxu0
    %v109 = vadd.f32 %v29, %v108
    %v110 = vpop.f32.mrb[0].mxu0
    %111 = vdwg.mxu0
    %v112 = vmax.f32 %v104, 0.0
    %v113 = vmax.f32 %v109, 0.0
    %v114 = vlaneseq
    %v115 = vshrl.u32 %v114, 7
    %v116 = vsub.s32 0, %v115
    %v117 = vrot.slane %v21, %v116
    %vm118 = vcmask 261120
    %v120 = vsel %vm118, %v112, 0
    %v123 = vsel %vm118, %v113, 0
    %125 = vmatprep.subr.mxu0 0.0
    %126 = vmatpush1.msra.mxu0 %v17
    %127 = vmatprep.subr.mxu0 0.0
    %128 = vmatpush1.msra.mxu0 %v18
    %129 = vmatprep.subr.mxu0 0.0
    %130 = vmatpush1.msra.mxu0 %v19
    %131 = vmatprep.subr.mxu0 0.0
    %132 = vmatpush1.msra.mxu0 %v20
    %133 = vmatprep.subr.mxu0 0.0
    %134 = vmatpush1.msra.mxu0 0.0
    %135 = vmatprep.subr.mxu0 0.0
    %136 = vmatpush1.msra.mxu0 0.0
    %137 = vmatprep.subr.mxu0 0.0
    %138 = vmatpush1.msra.mxu0 0.0
    %139 = vmatprep.subr.mxu0 0.0
    %140 = vmatpush1.msra.mxu0 0.0
    %141 = vmatprep.subr.mxu0 0.0
    %142 = vmatpush1.msra.mxu0 0.0
    %143 = vmatprep.subr.mxu0 0.0
    %144 = vmatpush1.msra.mxu0 0.0
    %145 = vmatprep.subr.mxu0 0.0
    %146 = vmatpush1.msra.mxu0 0.0
    %147 = vmatprep.subr.mxu0 0.0
    %148 = vmatpush1.msra.mxu0 0.0
    %149 = vmatprep.subr.mxu0 0.0
    %150 = vmatpush1.msra.mxu0 0.0
    %151 = vmatprep.subr.mxu0 0.0
    %152 = vmatpush1.msra.mxu0 0.0
    %153 = vmatprep.subr.mxu0 0.0
    %154 = vmatpush1.msra.mxu0 0.0
    %155 = vmatprep.subr.mxu0 0.0
    %156 = vmatpush1.msra.mxu0 0.0
    %157 = vmatprep.subr.mxu0 0.0
    %158 = vmatpush1.msra.mxu0 0.0
    %159 = vmatprep.subr.mxu0 0.0
    %160 = vmatpush1.msra.mxu0 0.0
    %161 = vmatprep.subr.mxu0 0.0
    %162 = vmatpush1.msra.mxu0 0.0
    %163 = vmatprep.subr.mxu0 0.0
    %164 = vmatpush1.msra.mxu0 0.0
    %165 = vmatprep.subr.mxu0 0.0
    %166 = vmatpush1.msra.mxu0 0.0
    %167 = vmatprep.subr.mxu0 0.0
    %168 = vmatpush1.msra.mxu0 0.0
    %169 = vmatprep.subr.mxu0 0.0
    %170 = vmatpush1.msra.mxu0 0.0
    %171 = vmatprep.subr.mxu0 0.0
    %172 = vmatpush1.msra.mxu0 0.0
    %173 = vmatprep.subr.mxu0 0.0
    %174 = vmatpush1.msra.mxu0 0.0
    %175 = vmatprep.subr.mxu0 0.0
    %176 = vmatpush1.msra.mxu0 0.0
    %177 = vmatprep.subr.mxu0 0.0
    %178 = vmatpush1.msra.mxu0 0.0
    %179 = vmatprep.subr.mxu0 0.0
    %180 = vmatpush1.msra.mxu0 0.0
    %181 = vmatprep.subr.mxu0 0.0
    %182 = vmatpush1.msra.mxu0 0.0
    %183 = vmatprep.subr.mxu0 0.0
    %184 = vmatpush1.msra.mxu0 0.0
    %185 = vmatprep.subr.mxu0 0.0
    %186 = vmatpush1.msra.mxu0 0.0
    %187 = vmatprep.subr.mxu0 0.0
    %188 = vmatpush1.msra.mxu0 0.0
    %189 = vmatprep.mubr.f32.mxu0 0.0
    %190 = vmatmul.mubr.f32.gmra.mrb[0].mxu0 %v120
    %v191 = vpop.f32.mrb[0].mxu0
    %v192 = vadd.f32 %v117, %v191
    %v193 = vpop.f32.mrb[0].mxu0
    %194 = vmatprep.mubr.f32.mxu0 0.0
    %195 = vmatmul.mubr.f32.gmra.mrb[0].mxu0 %v123
    %v196 = vpop.f32.mrb[0].mxu0
    %v197 = vadd.f32 %v117, %v196
    %v198 = vpop.f32.mrb[0].mxu0
    %199 = vdwg.mxu0
    %v200 = vmax.f32 %v192, 0.0
    %v201 = vmax.f32 %v197, 0.0
    %v202 = vmul.f32 %v200, %v200
    %v203 = vmul.f32 %v201, %v201
    %v204 = vsel %vm118, %v202, 0.0
    %205 = vadd.xlane.f32.xlu0 %v204
    %v206 = vpop.xlane.xlu0 %205
    %v207 = vsel %vm118, %v203, 0.0
    %208 = vadd.xlane.f32.xlu0 %v207
    %v209 = vpop.xlane.xlu0 %208
    %v211 = vsel %vm118, %v200, 0
    %v214 = vsel %vm118, %v201, 0
    %216 = vmatprep.subr.mxu0 0.0
    %217 = vmatpush1.xpose.msra.mxu0 %v211
    %218 = vmatprep.subr.mxu0 0.0
    %219 = vmatpush1.xpose.msra.mxu0 %v214
    %220 = vmatprep.subr.mxu0 0.0
    %221 = vmatpush1.xpose.msra.mxu0 0.0
    %222 = vmatprep.subr.mxu0 0.0
    %223 = vmatpush1.xpose.msra.mxu0 0.0
    %224 = vmatprep.subr.mxu0 0.0
    %225 = vmatpush1.xpose.msra.mxu0 0.0
    %226 = vmatprep.subr.mxu0 0.0
    %227 = vmatpush1.xpose.msra.mxu0 0.0
    %228 = vmatprep.subr.mxu0 0.0
    %229 = vmatpush1.xpose.msra.mxu0 0.0
    %230 = vmatprep.subr.mxu0 0.0
    %231 = vmatpush1.xpose.msra.mxu0 0.0
    %232 = vmatprep.subr.mxu0 0.0
    %233 = vmatpush1.xpose.msra.mxu0 0.0
    %234 = vmatprep.subr.mxu0 0.0
    %235 = vmatpush1.xpose.msra.mxu0 0.0
    %236 = vmatprep.subr.mxu0 0.0
    %237 = vmatpush1.xpose.msra.mxu0 0.0
    %238 = vmatprep.subr.mxu0 0.0
    %239 = vmatpush1.xpose.msra.mxu0 0.0
    %240 = vmatprep.subr.mxu0 0.0
    %241 = vmatpush1.xpose.msra.mxu0 0.0
    %242 = vmatprep.subr.mxu0 0.0
    %243 = vmatpush1.xpose.msra.mxu0 0.0
    %244 = vmatprep.subr.mxu0 0.0
    %245 = vmatpush1.xpose.msra.mxu0 0.0
    %246 = vmatprep.subr.mxu0 0.0
    %247 = vmatpush1.xpose.msra.mxu0 0.0
    %248 = vmatprep.subr.mxu0 0.0
    %249 = vmatpush1.xpose.msra.mxu0 0.0
    %250 = vmatprep.subr.mxu0 0.0
    %251 = vmatpush1.xpose.msra.mxu0 0.0
    %252 = vmatprep.subr.mxu0 0.0
    %253 = vmatpush1.xpose.msra.mxu0 0.0
    %254 = vmatprep.subr.mxu0 0.0
    %255 = vmatpush1.xpose.msra.mxu0 0.0
    %256 = vmatprep.subr.mxu0 0.0
    %257 = vmatpush1.xpose.msra.mxu0 0.0
    %258 = vmatprep.subr.mxu0 0.0
    %259 = vmatpush1.xpose.msra.mxu0 0.0
    %260 = vmatprep.subr.mxu0 0.0
    %261 = vmatpush1.xpose.msra.mxu0 0.0
    %262 = vmatprep.subr.mxu0 0.0
    %263 = vmatpush1.xpose.msra.mxu0 0.0
    %264 = vmatprep.subr.mxu0 0.0
    %265 = vmatpush1.xpose.msra.mxu0 0.0
    %266 = vmatprep.subr.mxu0 0.0
    %267 = vmatpush1.xpose.msra.mxu0 0.0
    %268 = vmatprep.subr.mxu0 0.0
    %269 = vmatpush1.xpose.msra.mxu0 0.0
    %270 = vmatprep.subr.mxu0 0.0
    %271 = vmatpush1.xpose.msra.mxu0 0.0
    %272 = vmatprep.subr.mxu0 0.0
    %273 = vmatpush1.xpose.msra.mxu0 0.0
    %274 = vmatprep.subr.mxu0 0.0
    %275 = vmatpush1.xpose.msra.mxu0 0.0
    %276 = vmatprep.subr.mxu0 0.0
    %277 = vmatpush1.xpose.msra.mxu0 0.0
    %278 = vmatprep.subr.mxu0 0.0
    %279 = vmatpush1.xpose.msra.mxu0 0.0
    %280 = vmatprep.mubr.f32.mxu0 0.0
    %281 = vmatmul.mubr.f32.gmra.mrb[0].mxu0 %v211
    %v282 = vpop.f32.mrb[0].mxu0
    %v283 = vadd.f32 0.0, %v282
    %v284 = vpop.f32.mrb[0].mxu0
    %285 = vmatprep.mubr.f32.mxu0 0.0
    %286 = vmatmul.mubr.f32.gmra.mrb[0].mxu0 %v214
    %v287 = vpop.f32.mrb[0].mxu0
    %v288 = vadd.f32 0.0, %v287
    %v289 = vpop.f32.mrb[0].mxu0
    %290 = vdwg.mxu0
    %291 = vxpose.xlu0.b32.start [1/16] %v206, 128
    %292 = vxpose.xlu0.b32.cont [2/16] %v209, 128
    %293 = vxpose.xlu0.b32.cont [3/16] 0.0, 128
    %294 = vxpose.xlu0.b32.cont [4/16] 0.0, 128
    %295 = vxpose.xlu0.b32.cont [5/16] 0.0, 128
    %296 = vxpose.xlu0.b32.cont [6/16] 0.0, 128
    %297 = vxpose.xlu0.b32.cont [7/16] 0.0, 128
    %298 = vxpose.xlu0.b32.cont [8/16] 0.0, 128
    %299 = vxpose.xlu0.b32.cont [9/16] 0.0, 128
    %300 = vxpose.xlu0.b32.cont [10/16] 0.0, 128
    %301 = vxpose.xlu0.b32.cont [11/16] 0.0, 128
    %302 = vxpose.xlu0.b32.cont [12/16] 0.0, 128
    %303 = vxpose.xlu0.b32.cont [13/16] 0.0, 128
    %304 = vxpose.xlu0.b32.cont [14/16] 0.0, 128
    %305 = vxpose.xlu0.b32.cont [15/16] 0.0, 128
    %306 = vxpose.xlu0.b32.end [16/16] 0.0, 128
    %v307 = vpop.trf.xlu0
    %v308 = vpop.trf.xlu0
    %v309 = vpop.trf.xlu0
    %v310 = vpop.trf.xlu0
    %v311 = vpop.trf.xlu0
    %v312 = vpop.trf.xlu0
    %v313 = vpop.trf.xlu0
    %v314 = vpop.trf.xlu0
    %v315 = vpop.trf.xlu0
    %v316 = vpop.trf.xlu0
    %v317 = vpop.trf.xlu0
    %v318 = vpop.trf.xlu0
    %v319 = vpop.trf.xlu0
    %v320 = vpop.trf.xlu0
    %v321 = vpop.trf.xlu0
    %v322 = vpop.trf.xlu0
    %v323 = vlaneseq
    %v324 = vshrl.u32 %v323, 7
    %v325 = vsub.s32 0, %v324
    %v326 = vrot.slane %v307, %v325
    %v327 = vadd.f32 %v206, %v326
    %v328 = vadd.f32 %v209, %v326
    %v329 = vmul.f32 %v283, 2.0
    %v330 = vmul.f32 %v288, 2.0
    %v331 = vsub.f32 %v327, %v329
    %v332 = vsub.f32 %v328, %v330
    %v333 = vmax.f32 %v331, 0.0
    %v334 = vmax.f32 %v332, 0.0
    %v335 = vsel %vm30, %v333, 0.0
    %v336 = vsel %vm30, %v334, 0.0
    %v337 = vadd.f32 %v335, %v336
    %338 = vadd.xlane.f32.xlu0 %v337
    %v339 = vpop.xlane.xlu0 %338
    %v340 = vrot.slane %v339, 4
    %v341 = vadd.f32 %v339, %v340
    %v342 = vrot.slane %v341, 2
    %v343 = vadd.f32 %v341, %v342
    %v344 = vrot.slane %v343, 1
    %v345 = vadd.f32 %v343, %v344
    %s346 = vtos %v345
    %v347 = vrcp.pop 240.0
    %s348 = vtos %v347
    %s349 = smul.f32 %s346, %s348
    %s350 = smax.f32 %s349, 1e-12
    %v351 = vstv %s350
    %v352 = vrcp.pop %v351
    %s353 = vtos %v352
    %s354 = smul.f32 4.0, %s353
    %s355 = ssub.f32 0.0, %s354
    %v356 = vstv %s355
    %v357 = vmul.f32 %v333, %v356
    %v358 = vmul.f32 %v334, %v356
    %v359 = vmul.f32 %v357, 1.442695
    %v360 = vpow.pop %v359
    %v361 = vmul.f32 %v358, 1.442695
    %v362 = vpow.pop %v361
    %v363 = vadd.f32 %v360, 0.0
    %v364 = vadd.f32 %v362, 0.0
    %v365 = vmul.f32 %v357, 0.5
    %v366 = vmul.f32 %v358, 0.5
    %v367 = vmul.f32 %v365, 1.442695
    %v368 = vpow.pop %v367
    %v369 = vmul.f32 %v366, 1.442695
    %v370 = vpow.pop %v369
    %v371 = vadd.f32 %v363, %v368
    %v372 = vadd.f32 %v364, %v370
    %v373 = vmul.f32 %v357, 0.25
    %v374 = vmul.f32 %v358, 0.25
    %v375 = vmul.f32 %v373, 1.442695
    %v376 = vpow.pop %v375
    %v377 = vmul.f32 %v374, 1.442695
    %v378 = vpow.pop %v377
    %v379 = vadd.f32 %v371, %v376
    %v380 = vadd.f32 %v372, %v378
    %v381 = vmul.f32 %v357, 0.125
    %v382 = vmul.f32 %v358, 0.125
    %v383 = vmul.f32 %v381, 1.442695
    %v384 = vpow.pop %v383
    %v385 = vmul.f32 %v382, 1.442695
    %v386 = vpow.pop %v385
    %v387 = vadd.f32 %v379, %v384
    %v388 = vadd.f32 %v380, %v386
    %v389 = vmul.f32 %v357, 0.0625
    %v390 = vmul.f32 %v358, 0.0625
    %v391 = vmul.f32 %v389, 1.442695
    %v392 = vpow.pop %v391
    %v393 = vmul.f32 %v390, 1.442695
    %v394 = vpow.pop %v393
    %v395 = vadd.f32 %v387, %v392
    %v396 = vadd.f32 %v388, %v394
    %v397 = vlaneseq
    %v398 = vand.u32 %v397, 127
    %vm399 = vcmp.lt.s32.totalorder %v398, 8
    %v400 = vsel %vm399, 1.0, -1.0
    %v401 = vlaneseq
    %v402 = vshrl.u32 %v401, 7
    %v403 = vadd.s32 %v402, 8
    %vm404 = vcmp.lt.s32.totalorder %v402, 8
    %vm405 = vcmp.lt.s32.totalorder %v403, 8
    %v406 = vsel %vm404, 1.0, -1.0
    %v407 = vsel %vm405, 1.0, -1.0
    %v408 = vmul.f32 %v395, %v400
    %v409 = vmul.f32 %v396, %v400
    %v410 = vsel %vm30, %v408, 0.0
    %411 = vadd.xlane.f32.xlu0 %v410
    %v412 = vpop.xlane.xlu0 %411
    %v413 = vsel %vm30, %v409, 0.0
    %414 = vadd.xlane.f32.xlu0 %v413
    %v415 = vpop.xlane.xlu0 %414
    %v416 = vmul.f32 %v412, %v406
    %v417 = vmul.f32 %v415, %v407
    %vm418 = vcmask 7168
    %v419 = vsel %vm418, %v416, 0.0
    %v420 = vsel %vm418, %v417, 0.0
    %v421 = vadd.f32 %v419, %v420
    %422 = vadd.xlane.f32.xlu0 %v421
    %v423 = vpop.xlane.xlu0 %422
    %v424 = vrot.slane %v423, 4
    %v425 = vadd.f32 %v423, %v424
    %v426 = vrot.slane %v425, 2
    %v427 = vadd.f32 %v425, %v426
    %v428 = vrot.slane %v427, 1
    %v429 = vadd.f32 %v427, %v428
    %s430 = vtos %v429
    %v431 = vrcp.pop 64.0
    %s432 = vtos %v431
    %s433 = smul.f32 %s430, %s432
    %s434 = scalar_lea.smem [#allocation2], 0
    %435 = sst [smem:[%s434]] %s433
    %v436 = vlaneseq
    %v437 = vshrl.u32 %v436, 7
    %v438 = vsub.s32 0, %v437
    %v439 = vrot.slane %v22, %v438
    %v440 = vmul.f32 %v200, %v439
    %v441 = vsel %vm118, %v440, 0.0
    %442 = vadd.xlane.f32.xlu0 %v441
    %v443 = vpop.xlane.xlu0 %442
    %v444 = vlaneseq
    %v445 = vshrl.u32 %v444, 7
    %v446 = vsub.s32 0, %v445
    %v447 = vrot.slane %v23, %v446
    %v448 = vadd.f32 %v443, %v447
    %449 = vst.msk [vmem:[%s3] sm:$0xff] %vm418, %v448
    // Predicated region
    $region10: #{net_dan_forward.1} parent=1 // pred_check
      _
    $region11: #{net_dan_forward.1} parent=1 // pred_check_branch
      %451 = sbr.rel (0) target = $region13
    $region12: #{net_dan_forward.1} parent=1 // pred_region
      %s453 = ssub.s32 16, 16
      %454 = vsyncadd [#allocation3], %s453
      %457 = dma.smem_to_hbm [#allocation2], 16, %s2, [#allocation3]
    $region13: #{net_dan_forward.1} parent=1 // pred_fallthru
      _
    // Predicated region
    $region14: #{net_dan_forward.1} parent=1 // pred_check
      _
    $region15: #{net_dan_forward.1} parent=1 // pred_check_branch
      %459 = sbr.rel (0) target = $region17
    $region16: #{net_dan_forward.1} parent=1 // pred_region
      _
    $region17: #{net_dan_forward.1} parent=1 // pred_fallthru
      _
    // Predicated region
    $region18: #{net_dan_forward.1} parent=1 // pred_check
      _
    $region19: #{net_dan_forward.1} parent=1 // pred_check_branch
      %461 = sbr.rel (0) target = $region21
    $region20: #{net_dan_forward.1} parent=1 // pred_region
      %462 = dma.done [#allocation3], 16
    $region21: #{net_dan_forward.1} parent=1 // pred_fallthru
      _
    // Predicated region
    $region22: #{net_dan_forward.1} parent=1 // pred_check
      _
    $region23: #{net_dan_forward.1} parent=1 // pred_check_branch
      %464 = sbr.rel (0) target = $region25
    $region24: #{net_dan_forward.1} parent=1 // pred_region
      _
    $region25: #{net_dan_forward.1} parent=1 // pred_fallthru
      _
    %465 = sfence
    %466 = vsyncpa [#allocation3], 1

</llo_original>
